<compile_context>
chip_gen: v5e
topology: v5e:2x2
jax: 0.10.0
libtpu: 0.0.40
codegen_flags: <defaults>
</compile_context>

<pallas_src>
import functools

import jax
import jax.numpy as jnp
from jax.experimental import pallas as pl
from jax.experimental.pallas import tpu as pltpu


def _round_up(n: int, m: int) -> int:
    return ((n + m - 1) // m) * m


def mlp4_kernel(x_ref, w1_ref, b1_ref, w2_ref, b2_ref, w3_ref, b3_ref,
                w4_ref, b4_ref, o_ref):
    # One batch tile per grid step. Cast the f32 x tile to bf16 once so all four
    # matmuls run as native bf16 MXU ops with f32 accumulation; the bias-add and
    # ReLU stay in f32.
    xb = x_ref[...].astype(jnp.bfloat16)

    h = jnp.dot(xb, w1_ref[...], preferred_element_type=jnp.float32) + b1_ref[...]
    h = jnp.maximum(h, 0.0).astype(jnp.bfloat16)

    h = jnp.dot(h, w2_ref[...], preferred_element_type=jnp.float32) + b2_ref[...]
    h = jnp.maximum(h, 0.0).astype(jnp.bfloat16)

    h = jnp.dot(h, w3_ref[...], preferred_element_type=jnp.float32) + b3_ref[...]
    h = jnp.maximum(h, 0.0).astype(jnp.bfloat16)

    out = jnp.dot(h, w4_ref[...], preferred_element_type=jnp.float32) + b4_ref[...]
    o_ref[...] = out.astype(o_ref.dtype)


@functools.partial(jax.jit, static_argnames=("tile_b",))
def mlp4_forward(x, params, *, tile_b=1024):
    """x: (B, F) float32. params: bf16 weights pre-transposed (in, out), f32 (1, out) biases."""
    B, F = x.shape
    C = params["w4"].shape[1]

    # Big 8-aligned batch tiles amortize per-step overhead and the 4-lane-wide
    # masked output stores; never bigger than the (padded) batch itself.
    tb = min(_round_up(tile_b, 8), _round_up(B, 8))
    Bp = _round_up(B, tb)
    xp = jnp.pad(x, ((0, Bp - B), (0, 0))) if Bp != B else x
    grid = (Bp // tb,)

    # Weights/biases: full-array blocks with constant index maps => VMEM-resident
    # across all grid steps (no per-step re-DMA).
    resident = lambda arr: pl.BlockSpec(arr.shape, lambda i: (0,) * arr.ndim)

    flops = 2 * Bp * (F * (2 * F) + (2 * F) * (2 * F) + (2 * F) * F + F * C)
    bytes_accessed = (
        xp.size * xp.dtype.itemsize
        + sum(int(v.size) * v.dtype.itemsize for v in params.values())
        + Bp * C * 4
    )

    out = pl.pallas_call(
        mlp4_kernel,
        out_shape=jax.ShapeDtypeStruct((Bp, C), jnp.float32),
        grid=grid,
        in_specs=[
            pl.BlockSpec((tb, F), lambda i: (i, 0)),        # x: tiled over batch
            resident(params["w1"]), resident(params["b1"]),
            resident(params["w2"]), resident(params["b2"]),
            resident(params["w3"]), resident(params["b3"]),
            resident(params["w4"]), resident(params["b4"]),
        ],
        out_specs=pl.BlockSpec((tb, C), lambda i: (i, 0)),
        compiler_params=pltpu.CompilerParams(
            dimension_semantics=("parallel",),              # both TCs on v7x
        ),
        cost_estimate=pl.CostEstimate(
            flops=flops, transcendentals=0, bytes_accessed=bytes_accessed),
    )(xp, params["w1"], params["b1"], params["w2"], params["b2"],
      params["w3"], params["b3"], params["w4"], params["b4"])

    return out[:B]


@jax.jit
def mlp4_reference(x, params):
    """Plain-JAX forward with the same mixed precision (bf16 dots, f32 accum/elementwise)."""
    def layer(h, w, b, relu):
        y = jnp.dot(h.astype(jnp.bfloat16), w,
                    preferred_element_type=jnp.float32) + b
        return jnp.maximum(y, 0.0) if relu else y
    h = layer(x, params["w1"], params["b1"], True)
    h = layer(h, params["w2"], params["b2"], True)
    h = layer(h, params["w3"], params["b3"], True)
    return layer(h, params["w4"], params["b4"], False)


def mlp4_apply(x, params, *, min_pallas_batch=64, tile_b=1024):
    """Dispatch: tiny batches go to plain XLA fusion (launch overhead dominates);
    larger batches use the tiled Pallas kernel."""
    if x.shape[0] < min_pallas_batch:
        return mlp4_reference(x, params)
    return mlp4_forward(x, params, tile_b=tile_b)


def init_params(key, feature_num, n_classes):
    """'he' (kaiming_normal) init like _init_weights('he'): W ~ N(0, 2/fan_in), b = 0.
    Weights pre-transposed to (in, out) and stored in bf16; biases in f32."""
    dims = [
        (feature_num, feature_num * 2),       # fc1
        (feature_num * 2, feature_num * 2),   # fc2
        (feature_num * 2, feature_num),       # fc3
        (feature_num, n_classes),             # fc4
    ]
    params = {}
    for i, ((fan_in, fan_out), k) in enumerate(zip(dims, jax.random.split(key, len(dims))), 1):
        std = (2.0 / fan_in) ** 0.5
        w = jax.random.normal(k, (fan_in, fan_out), jnp.float32) * std
        params[f"w{i}"] = w.astype(jnp.bfloat16)
        params[f"b{i}"] = jnp.zeros((1, fan_out), jnp.float32)
    return params


if __name__ == "__main__":
    key = jax.random.PRNGKey(0)
    k_param, k_x1, k_x2 = jax.random.split(key, 3)

    feature_num, n_classes = 16, 4
    params = init_params(k_param, feature_num, n_classes)

    # Small batch (toy size implied by the module).
    x_small = jax.random.normal(k_x1, (8, feature_num), jnp.float32)
    out_small = jax.block_until_ready(mlp4_forward(x_small, params))
    ref_small = mlp4_reference(x_small, params)
    assert out_small.shape == (8, n_classes)
    assert jnp.allclose(out_small, ref_small, atol=2e-3, rtol=2e-3), \
        float(jnp.max(jnp.abs(out_small - ref_small)))

    # Larger, non-multiple-of-tile batch to exercise the batch grid + pad/slice path.
    x_big = jax.random.normal(k_x2, (300, feature_num), jnp.float32)
    out_big = jax.block_until_ready(mlp4_forward(x_big, params, tile_b=128))
    ref_big = mlp4_reference(x_big, params)
    assert out_big.shape == (300, n_classes)
    assert jnp.allclose(out_big, ref_big, atol=2e-3, rtol=2e-3), \
        float(jnp.max(jnp.abs(out_big - ref_big)))

    print("KERNEL_OK")
</pallas_src>

<mosaic_0001>
module attributes {stable_mosaic.version = 11 : i64} {
  func.func @mlp4_kernel(%arg0: i32, %arg1: memref<8x16xf32, #tpu.memory_space<vmem>>, %arg2: memref<16x32xbf16, #tpu.memory_space<vmem>>, %arg3: memref<1x32xf32, #tpu.memory_space<vmem>>, %arg4: memref<32x32xbf16, #tpu.memory_space<vmem>>, %arg5: memref<1x32xf32, #tpu.memory_space<vmem>>, %arg6: memref<32x16xbf16, #tpu.memory_space<vmem>>, %arg7: memref<1x16xf32, #tpu.memory_space<vmem>>, %arg8: memref<16x4xbf16, #tpu.memory_space<vmem>>, %arg9: memref<1x4xf32, #tpu.memory_space<vmem>>, %arg10: memref<8x4xf32, #tpu.memory_space<vmem>>) attributes {dimension_semantics = [#tpu.dimension_semantics<parallel>], iteration_bounds = array<i64: 1>, scalar_prefetch = 0 : i64, scratch_operands = 0 : i64, tpu.core_type = #tpu.core_type<tc>, window_params = [{transform_indices = @transform_0, window_bounds = array<i64: 8, 16>}, {pipeline_mode = #tpu.pipeline_mode<synchronous>, transform_indices = @transform_1, window_bounds = array<i64: 16, 32>}, {pipeline_mode = #tpu.pipeline_mode<synchronous>, transform_indices = @transform_2, window_bounds = array<i64: 1, 32>}, {pipeline_mode = #tpu.pipeline_mode<synchronous>, transform_indices = @transform_3, window_bounds = array<i64: 32, 32>}, {pipeline_mode = #tpu.pipeline_mode<synchronous>, transform_indices = @transform_4, window_bounds = array<i64: 1, 32>}, {pipeline_mode = #tpu.pipeline_mode<synchronous>, transform_indices = @transform_5, window_bounds = array<i64: 32, 16>}, {pipeline_mode = #tpu.pipeline_mode<synchronous>, transform_indices = @transform_6, window_bounds = array<i64: 1, 16>}, {pipeline_mode = #tpu.pipeline_mode<synchronous>, transform_indices = @transform_7, window_bounds = array<i64: 16, 4>}, {pipeline_mode = #tpu.pipeline_mode<synchronous>, transform_indices = @transform_8, window_bounds = array<i64: 1, 4>}, {transform_indices = @transform_9, window_bounds = array<i64: 8, 4>}]} {
    %c0 = arith.constant 0 : index
    %c0_0 = arith.constant 0 : index
    %0 = vector.load %arg1[%c0, %c0_0] : memref<8x16xf32, #tpu.memory_space<vmem>>, vector<8x16xf32>
    %1 = arith.truncf %0 : vector<8x16xf32> to vector<8x16xbf16>
    %c0_1 = arith.constant 0 : index
    %c0_2 = arith.constant 0 : index
    %2 = vector.load %arg2[%c0_1, %c0_2] : memref<16x32xbf16, #tpu.memory_space<vmem>>, vector<16x32xbf16>
    %cst = arith.constant dense<0.000000e+00> : vector<8x32xf32>
    %3 = tpu.matmul %1, %2, %cst {dimension_numbers = #tpu.dot_dimension_numbers<[1], [0], [0], [1], [0, 0, 1, 1], [], []>} : vector<8x16xbf16>, vector<16x32xbf16>, vector<8x32xf32> -> vector<8x32xf32>
    %c0_3 = arith.constant 0 : index
    %c0_4 = arith.constant 0 : index
    %4 = vector.load %arg3[%c0_3, %c0_4] : memref<1x32xf32, #tpu.memory_space<vmem>>, vector<1x32xf32>
    %5 = vector.broadcast %4 : vector<1x32xf32> to vector<8x32xf32>
    %6 = arith.addf %3, %5 : vector<8x32xf32>
    %cst_5 = arith.constant 0.000000e+00 : f32
    %7 = vector.broadcast %cst_5 : f32 to vector<8x32xf32>
    %8 = arith.maximumf %6, %7 : vector<8x32xf32>
    %9 = arith.truncf %8 : vector<8x32xf32> to vector<8x32xbf16>
    %c0_6 = arith.constant 0 : index
    %c0_7 = arith.constant 0 : index
    %10 = vector.load %arg4[%c0_6, %c0_7] : memref<32x32xbf16, #tpu.memory_space<vmem>>, vector<32x32xbf16>
    %cst_8 = arith.constant dense<0.000000e+00> : vector<8x32xf32>
    %11 = tpu.matmul %9, %10, %cst_8 {dimension_numbers = #tpu.dot_dimension_numbers<[1], [0], [0], [1], [0, 0, 1, 1], [], []>} : vector<8x32xbf16>, vector<32x32xbf16>, vector<8x32xf32> -> vector<8x32xf32>
    %c0_9 = arith.constant 0 : index
    %c0_10 = arith.constant 0 : index
    %12 = vector.load %arg5[%c0_9, %c0_10] : memref<1x32xf32, #tpu.memory_space<vmem>>, vector<1x32xf32>
    %13 = vector.broadcast %12 : vector<1x32xf32> to vector<8x32xf32>
    %14 = arith.addf %11, %13 : vector<8x32xf32>
    %cst_11 = arith.constant 0.000000e+00 : f32
    %15 = vector.broadcast %cst_11 : f32 to vector<8x32xf32>
    %16 = arith.maximumf %14, %15 : vector<8x32xf32>
    %17 = arith.truncf %16 : vector<8x32xf32> to vector<8x32xbf16>
    %c0_12 = arith.constant 0 : index
    %c0_13 = arith.constant 0 : index
    %18 = vector.load %arg6[%c0_12, %c0_13] : memref<32x16xbf16, #tpu.memory_space<vmem>>, vector<32x16xbf16>
    %cst_14 = arith.constant dense<0.000000e+00> : vector<8x16xf32>
    %19 = tpu.matmul %17, %18, %cst_14 {dimension_numbers = #tpu.dot_dimension_numbers<[1], [0], [0], [1], [0, 0, 1, 1], [], []>} : vector<8x32xbf16>, vector<32x16xbf16>, vector<8x16xf32> -> vector<8x16xf32>
    %c0_15 = arith.constant 0 : index
    %c0_16 = arith.constant 0 : index
    %20 = vector.load %arg7[%c0_15, %c0_16] : memref<1x16xf32, #tpu.memory_space<vmem>>, vector<1x16xf32>
    %21 = vector.broadcast %20 : vector<1x16xf32> to vector<8x16xf32>
    %22 = arith.addf %19, %21 : vector<8x16xf32>
    %cst_17 = arith.constant 0.000000e+00 : f32
    %23 = vector.broadcast %cst_17 : f32 to vector<8x16xf32>
    %24 = arith.maximumf %22, %23 : vector<8x16xf32>
    %25 = arith.truncf %24 : vector<8x16xf32> to vector<8x16xbf16>
    %c0_18 = arith.constant 0 : index
    %c0_19 = arith.constant 0 : index
    %26 = vector.load %arg8[%c0_18, %c0_19] : memref<16x4xbf16, #tpu.memory_space<vmem>>, vector<16x4xbf16>
    %cst_20 = arith.constant dense<0.000000e+00> : vector<8x4xf32>
    %27 = tpu.matmul %25, %26, %cst_20 {dimension_numbers = #tpu.dot_dimension_numbers<[1], [0], [0], [1], [0, 0, 1, 1], [], []>} : vector<8x16xbf16>, vector<16x4xbf16>, vector<8x4xf32> -> vector<8x4xf32>
    %c0_21 = arith.constant 0 : index
    %c0_22 = arith.constant 0 : index
    %28 = vector.load %arg9[%c0_21, %c0_22] : memref<1x4xf32, #tpu.memory_space<vmem>>, vector<1x4xf32>
    %29 = vector.broadcast %28 : vector<1x4xf32> to vector<8x4xf32>
    %30 = arith.addf %27, %29 : vector<8x4xf32>
    %c0_23 = arith.constant 0 : index
    %c0_24 = arith.constant 0 : index
    %31 = vector.load %arg10[%c0_23, %c0_24] : memref<8x4xf32, #tpu.memory_space<vmem>>, vector<8x4xf32>
    tpu.vector_store %arg10[%c0_23, %c0_24], %30 {strides = array<i32>} : memref<8x4xf32, #tpu.memory_space<vmem>>, vector<8x4xf32>,
    return
  }
  func.func @transform_0(%arg0: i32) -> (i32, i32) {
    %c0_i32 = arith.constant 0 : i32
    %c0_i32_0 = arith.constant 0 : i32
    return %arg0, %c0_i32 : i32, i32
  }
  func.func @transform_1(%arg0: i32) -> (i32, i32) {
    %c0_i32 = arith.constant 0 : i32
    %c0_i32_0 = arith.constant 0 : i32
    %c0_i32_1 = arith.constant 0 : i32
    return %c0_i32, %c0_i32_0 : i32, i32
  }
  func.func @transform_2(%arg0: i32) -> (i32, i32) {
    %c0_i32 = arith.constant 0 : i32
    %c0_i32_0 = arith.constant 0 : i32
    %c0_i32_1 = arith.constant 0 : i32
    return %c0_i32, %c0_i32_0 : i32, i32
  }
  func.func @transform_3(%arg0: i32) -> (i32, i32) {
    %c0_i32 = arith.constant 0 : i32
    %c0_i32_0 = arith.constant 0 : i32
    %c0_i32_1 = arith.constant 0 : i32
    return %c0_i32, %c0_i32_0 : i32, i32
  }
  func.func @transform_4(%arg0: i32) -> (i32, i32) {
    %c0_i32 = arith.constant 0 : i32
    %c0_i32_0 = arith.constant 0 : i32
    %c0_i32_1 = arith.constant 0 : i32
    return %c0_i32, %c0_i32_0 : i32, i32
  }
  func.func @transform_5(%arg0: i32) -> (i32, i32) {
    %c0_i32 = arith.constant 0 : i32
    %c0_i32_0 = arith.constant 0 : i32
    %c0_i32_1 = arith.constant 0 : i32
    return %c0_i32, %c0_i32_0 : i32, i32
  }
  func.func @transform_6(%arg0: i32) -> (i32, i32) {
    %c0_i32 = arith.constant 0 : i32
    %c0_i32_0 = arith.constant 0 : i32
    %c0_i32_1 = arith.constant 0 : i32
    return %c0_i32, %c0_i32_0 : i32, i32
  }
  func.func @transform_7(%arg0: i32) -> (i32, i32) {
    %c0_i32 = arith.constant 0 : i32
    %c0_i32_0 = arith.constant 0 : i32
    %c0_i32_1 = arith.constant 0 : i32
    return %c0_i32, %c0_i32_0 : i32, i32
  }
  func.func @transform_8(%arg0: i32) -> (i32, i32) {
    %c0_i32 = arith.constant 0 : i32
    %c0_i32_0 = arith.constant 0 : i32
    %c0_i32_1 = arith.constant 0 : i32
    return %c0_i32, %c0_i32_0 : i32, i32
  }
  func.func @transform_9(%arg0: i32) -> (i32, i32) {
    %c0_i32 = arith.constant 0 : i32
    %c0_i32_0 = arith.constant 0 : i32
    return %arg0, %c0_i32 : i32, i32
  }
}

</mosaic_0001>

<llo_original>
// kernel: mlp4_forward.1
$region0: #{mlp4_forward.1}
  #allocation0 [shape = 'u32[]', space=smem, size = 0x4, offset = 0x4, fixed_abs, tag = 'smem constant byte address 0x4 - core index']
  #allocation1 [shape = 'u32[72,128]{1,0:T(1,128)}', space=vmem, size = 0x9000, scoped, tag = 'internal scratch']
  %s0 = inlined_call_operand.vmem [shape: f32[8,16], index: 0, kind: input, shape index: {}]
  %s1 = inlined_call_operand.vmem [shape: bf16[16,32], index: 1, kind: input, shape index: {}]
  %s2 = inlined_call_operand.hbm [shape: f32[1,32], index: 2, kind: input, shape index: {}]
  %s3 = inlined_call_operand.vmem [shape: bf16[32,32], index: 3, kind: input, shape index: {}]
  %s4 = inlined_call_operand.hbm [shape: f32[1,32], index: 4, kind: input, shape index: {}]
  %s5 = inlined_call_operand.vmem [shape: bf16[32,16], index: 5, kind: input, shape index: {}]
  %s6 = inlined_call_operand.hbm [shape: f32[1,16], index: 6, kind: input, shape index: {}]
  %s7 = inlined_call_operand.vmem [shape: bf16[16,4], index: 7, kind: input, shape index: {}]
  %s8 = inlined_call_operand.hbm [shape: f32[1,4], index: 8, kind: input, shape index: {}]
  %s9 = inlined_call_operand.vmem [shape: f32[8,4], index: 9, kind: output, shape index: {}]
  %s10 = sld [smem:[#allocation0]]
  $region62: #{mlp4_forward.1} parent=0
    _
  %s12 = ssub.s32 1, %s10
  %s13 = scalar_select 0, %s12, %s10
  $region1: #{mlp4_forward.1} parent=0
    #allocation2 [shape = 'u8[512]{0}', space=vmem, size = 0x400, scoped, tag = 'input window, operand 2, single buffered']
    #allocation3 [shape = 's32[1]{0}', space=sflag, size = 0x4, scoped, tag = 'scoped memory for mlp4_forward.1']
    #allocation4 [shape = 'u8[512]{0}', space=vmem, size = 0x400, scoped, tag = 'input window, operand 4, single buffered']
    #allocation5 [shape = 's32[1]{0}', space=sflag, size = 0x4, scoped, tag = 'scoped memory for mlp4_forward.1']
    #allocation6 [shape = 'u8[512]{0}', space=vmem, size = 0x400, scoped, tag = 'input window, operand 6, single buffered']
    #allocation7 [shape = 'u8[512]{0}', space=vmem, size = 0x400, scoped, tag = 'input window, operand 8, single buffered']
    #allocation8 [shape = 's32[1]{0}', space=sflag, size = 0x4, scoped, tag = 'scoped memory for mlp4_forward.1']
    %14 = vsyncpa [#allocation3], 0
    %15 = vsyncpa [#allocation5], 0
    %16 = vsyncpa [#allocation8], 0
    // Predicated region
    $region2: #{mlp4_forward.1} parent=1 // pred_check
      _
    $region3: #{mlp4_forward.1} parent=1 // pred_check_branch
      %18 = sbr.rel (0) target = $region5
    $region4: #{mlp4_forward.1} parent=1 // pred_region
      _
    $region5: #{mlp4_forward.1} parent=1 // pred_fallthru
      _
    // Predicated region
    $region6: #{mlp4_forward.1} parent=1 // pred_check
      _
    $region7: #{mlp4_forward.1} parent=1 // pred_check_branch
      %20 = sbr.rel (0) target = $region9
    $region8: #{mlp4_forward.1} parent=1 // pred_region
      _
    $region9: #{mlp4_forward.1} parent=1 // pred_fallthru
      _
    // Predicated region
    $region10: #{mlp4_forward.1} parent=1 // pred_check
      _
    $region11: #{mlp4_forward.1} parent=1 // pred_check_branch
      %22 = sbr.rel (0) target = $region13
    $region12: #{mlp4_forward.1} parent=1 // pred_region
      %24 = vsyncadd [#allocation3], 0
      %s26 = sshll.u32 %s2, 4
      %s27 = int_to_ptr.hbm [resolvable:$true] %s26
      %s28 = sshll.u32 [#allocation2], 4
      %s29 = int_to_ptr.vmem [resolvable:$true] %s28
      %31 = dma.hbm_to_vmem [thread:$0]  %s27, 16, %s29, [#allocation3]
    $region13: #{mlp4_forward.1} parent=1 // pred_fallthru
      _
    // Predicated region
    $region14: #{mlp4_forward.1} parent=1 // pred_check
      _
    $region15: #{mlp4_forward.1} parent=1 // pred_check_branch
      %33 = sbr.rel (0) target = $region17
    $region16: #{mlp4_forward.1} parent=1 // pred_region
      _
    $region17: #{mlp4_forward.1} parent=1 // pred_fallthru
      _
    // Predicated region
    $region18: #{mlp4_forward.1} parent=1 // pred_check
      _
    $region19: #{mlp4_forward.1} parent=1 // pred_check_branch
      %35 = sbr.rel (0) target = $region21
    $region20: #{mlp4_forward.1} parent=1 // pred_region
      %37 = vsyncadd [#allocation5], 0
      %s39 = sshll.u32 %s4, 4
      %s40 = int_to_ptr.hbm [resolvable:$true] %s39
      %s41 = sshll.u32 [#allocation4], 4
      %s42 = int_to_ptr.vmem [resolvable:$true] %s41
      %44 = dma.hbm_to_vmem [thread:$0]  %s40, 16, %s42, [#allocation5]
    $region21: #{mlp4_forward.1} parent=1 // pred_fallthru
      _
    // Predicated region
    $region22: #{mlp4_forward.1} parent=1 // pred_check
      _
    $region23: #{mlp4_forward.1} parent=1 // pred_check_branch
      %46 = sbr.rel (0) target = $region25
    $region24: #{mlp4_forward.1} parent=1 // pred_region
      _
    $region25: #{mlp4_forward.1} parent=1 // pred_fallthru
      _
    // Predicated region
    $region26: #{mlp4_forward.1} parent=1 // pred_check
      _
    $region27: #{mlp4_forward.1} parent=1 // pred_check_branch
      %48 = sbr.rel (0) target = $region29
    $region28: #{mlp4_forward.1} parent=1 // pred_region
      %50 = vsyncadd [#allocation5], 0
      %s52 = sshll.u32 %s6, 4
      %s53 = int_to_ptr.hbm [resolvable:$true] %s52
      %s54 = sshll.u32 [#allocation6], 4
      %s55 = int_to_ptr.vmem [resolvable:$true] %s54
      %57 = dma.hbm_to_vmem [thread:$0]  %s53, 16, %s55, [#allocation5]
    $region29: #{mlp4_forward.1} parent=1 // pred_fallthru
      _
    // Predicated region
    $region30: #{mlp4_forward.1} parent=1 // pred_check
      _
    $region31: #{mlp4_forward.1} parent=1 // pred_check_branch
      %59 = sbr.rel (0) target = $region33
    $region32: #{mlp4_forward.1} parent=1 // pred_region
      _
    $region33: #{mlp4_forward.1} parent=1 // pred_fallthru
      _
    // Predicated region
    $region34: #{mlp4_forward.1} parent=1 // pred_check
      _
    $region35: #{mlp4_forward.1} parent=1 // pred_check_branch
      %61 = sbr.rel (0) target = $region37
    $region36: #{mlp4_forward.1} parent=1 // pred_region
      %63 = vsyncadd [#allocation8], 0
      %s65 = sshll.u32 %s8, 4
      %s66 = int_to_ptr.hbm [resolvable:$true] %s65
      %s67 = sshll.u32 [#allocation7], 4
      %s68 = int_to_ptr.vmem [resolvable:$true] %s67
      %70 = dma.hbm_to_vmem [thread:$0]  %s66, 16, %s68, [#allocation8]
    $region37: #{mlp4_forward.1} parent=1 // pred_fallthru
      _
    // Predicated region
    $region38: #{mlp4_forward.1} parent=1 // pred_check
      _
    $region39: #{mlp4_forward.1} parent=1 // pred_check_branch
      %72 = sbr.rel (0) target = $region41
    $region40: #{mlp4_forward.1} parent=1 // pred_region
      %74 = dma.done [#allocation3], 16
    $region41: #{mlp4_forward.1} parent=1 // pred_fallthru
      _
    // Predicated region
    $region42: #{mlp4_forward.1} parent=1 // pred_check
      _
    $region43: #{mlp4_forward.1} parent=1 // pred_check_branch
      %76 = sbr.rel (0) target = $region45
    $region44: #{mlp4_forward.1} parent=1 // pred_region
      %78 = dma.done [#allocation5], 16
    $region45: #{mlp4_forward.1} parent=1 // pred_fallthru
      _
    // Predicated region
    $region46: #{mlp4_forward.1} parent=1 // pred_check
      _
    $region47: #{mlp4_forward.1} parent=1 // pred_check_branch
      %80 = sbr.rel (0) target = $region49
    $region48: #{mlp4_forward.1} parent=1 // pred_region
      %82 = dma.done [#allocation5], 16
    $region49: #{mlp4_forward.1} parent=1 // pred_fallthru
      _
    // Predicated region
    $region50: #{mlp4_forward.1} parent=1 // pred_check
      _
    $region51: #{mlp4_forward.1} parent=1 // pred_check_branch
      %84 = sbr.rel (0) target = $region53
    $region52: #{mlp4_forward.1} parent=1 // pred_region
      %86 = dma.done [#allocation8], 16
    $region53: #{mlp4_forward.1} parent=1 // pred_fallthru
      _
    %v88 = vld [vmem:[%s0] sm:$0xff]
    %v89 = vpack.c.bf16 %v88, %v88
    %v90 = vld [vmem:[%s1] sm:$0xf]
    %v91 = vld [vmem:[%s1 + $0x4] sm:$0xf]
    %v92 = vld [vmem:[#allocation2] sm:$0x1]
    %v94 = vperm.slane %v92, 0
    %v98 = vunpack.c.l.b16 %v90
    %v99 = vunpack.c.l.b16 %v91
    %v100 = vpack.c.b16 %v99, %v98
    %vm102 = vcmask 130048
    %v104 = vsel %vm102, %v89, 0
    %106 = vmatpush.bf16.msra.mxu0 0
    %107 = vmatpush.bf16.msra.mxu0 0
    %108 = vmatpush.bf16.msra.mxu0 0
    %109 = vmatpush.bf16.msra.mxu0 0
    %110 = vmatpush.bf16.msra.mxu0 0
    %111 = vmatpush.bf16.msra.mxu0 0
    %112 = vmatpush.bf16.msra.mxu0 0
    %113 = vmatpush.bf16.msra.mxu0 %v100
    %114 = vmatmul.bf16.gmra.mxu0 %v104
    %v115 = vpop.f32.mrf.mxu0
    %v116 = vadd.f32 %v94, %v115
    %v117 = vpop.f32.mrf.mxu0
    %118 = vdwg.mxu0
    %v119 = vmax.f32 %v116, 0.0
    %v120 = vpack.c.bf16 %v119, %v119
    %v121 = vld [vmem:[%s3] sm:$0xf]
    %v122 = vld [vmem:[%s3 + $0x4] sm:$0xf]
    %v123 = vld [vmem:[%s3 + $0x8] sm:$0xf]
    %v124 = vld [vmem:[%s3 + $0xc] sm:$0xf]
    %v125 = vld [vmem:[#allocation4] sm:$0x1]
    %v127 = vperm.slane %v125, 0
    %v133 = vunpack.c.l.b16 %v121
    %v134 = vunpack.c.l.b16 %v122
    %v135 = vunpack.c.l.b16 %v123
    %v136 = vunpack.c.l.b16 %v124
    %v137 = vpack.c.b16 %v134, %v133
    %v138 = vpack.c.b16 %v136, %v135
    %vm141 = vcmask 261120
    %v143 = vsel %vm141, %v120, 0
    %145 = vmatpush.bf16.msra.mxu0 0
    %146 = vmatpush.bf16.msra.mxu0 0
    %147 = vmatpush.bf16.msra.mxu0 0
    %148 = vmatpush.bf16.msra.mxu0 0
    %149 = vmatpush.bf16.msra.mxu0 0
    %150 = vmatpush.bf16.msra.mxu0 0
    %151 = vmatpush.bf16.msra.mxu0 %v138
    %152 = vmatpush.bf16.msra.mxu0 %v137
    %153 = vmatmul.bf16.gmra.mxu0 %v143
    %v154 = vpop.f32.mrf.mxu0
    %v155 = vadd.f32 %v127, %v154
    %v156 = vpop.f32.mrf.mxu0
    %157 = vdwg.mxu0
    %v158 = vmax.f32 %v155, 0.0
    %v159 = vpack.c.bf16 %v158, %v158
    %v160 = vld [vmem:[%s5] sm:$0xf]
    %v161 = vld [vmem:[%s5 + $0x4] sm:$0xf]
    %v162 = vld [vmem:[%s5 + $0x8] sm:$0xf]
    %v163 = vld [vmem:[%s5 + $0xc] sm:$0xf]
    %v164 = vld [vmem:[#allocation6] sm:$0x1]
    %v166 = vperm.slane %v164, 0
    %v172 = vunpack.c.l.b16 %v160
    %v173 = vunpack.c.l.b16 %v161
    %v174 = vunpack.c.l.b16 %v162
    %v175 = vunpack.c.l.b16 %v163
    %v176 = vpack.c.b16 %v173, %v172
    %v177 = vpack.c.b16 %v175, %v174
    %v181 = vsel %vm141, %v159, 0
    %183 = vmatpush.bf16.msra.mxu0 0
    %184 = vmatpush.bf16.msra.mxu0 0
    %185 = vmatpush.bf16.msra.mxu0 0
    %186 = vmatpush.bf16.msra.mxu0 0
    %187 = vmatpush.bf16.msra.mxu0 0
    %188 = vmatpush.bf16.msra.mxu0 0
    %189 = vmatpush.bf16.msra.mxu0 %v177
    %190 = vmatpush.bf16.msra.mxu0 %v176
    %191 = vmatmul.bf16.gmra.mxu0 %v181
    %v192 = vpop.f32.mrf.mxu0
    %v193 = vadd.f32 %v166, %v192
    %v194 = vpop.f32.mrf.mxu0
    %195 = vdwg.mxu0
    %v196 = vmax.f32 %v193, 0.0
    %v197 = vpack.c.bf16 %v196, %v196
    %v198 = vld [vmem:[%s7] sm:$0xf]
    %v199 = vld [vmem:[%s7 + $0x4] sm:$0xf]
    %v200 = vld [vmem:[#allocation7] sm:$0x1]
    %v202 = vperm.slane %v200, 0
    %v206 = vunpack.c.l.b16 %v198
    %v207 = vunpack.c.l.b16 %v199
    %v208 = vpack.c.b16 %v207, %v206
    %v211 = vsel %vm102, %v197, 0
    %213 = vmatpush.bf16.msra.mxu0 0
    %214 = vmatpush.bf16.msra.mxu0 0
    %215 = vmatpush.bf16.msra.mxu0 0
    %216 = vmatpush.bf16.msra.mxu0 0
    %217 = vmatpush.bf16.msra.mxu0 0
    %218 = vmatpush.bf16.msra.mxu0 0
    %219 = vmatpush.bf16.msra.mxu0 0
    %220 = vmatpush.bf16.msra.mxu0 %v208
    %221 = vmatmul.bf16.gmra.mxu0 %v211
    %v222 = vpop.f32.mrf.mxu0
    %v223 = vadd.f32 %v202, %v222
    %v224 = vpop.f32.mrf.mxu0
    %225 = vdwg.mxu0
    %vm226 = vcmask 31744
    %227 = vst.msk [vmem:[%s9] sm:$0xff] %vm226, %v223
    // Predicated region
    $region54: #{mlp4_forward.1} parent=1 // pred_check
      _
    $region55: #{mlp4_forward.1} parent=1 // pred_check_branch
      %229 = sbr.rel (0) target = $region57
    $region56: #{mlp4_forward.1} parent=1 // pred_region
      _
    $region57: #{mlp4_forward.1} parent=1 // pred_fallthru
      _
    // Predicated region
    $region58: #{mlp4_forward.1} parent=1 // pred_check
      _
    $region59: #{mlp4_forward.1} parent=1 // pred_check_branch
      %231 = sbr.rel (0) target = $region61
    $region60: #{mlp4_forward.1} parent=1 // pred_region
      _
    $region61: #{mlp4_forward.1} parent=1 // pred_fallthru
      _
    %232 = vsyncpa [#allocation3], 1
    %233 = vsyncpa [#allocation5], 1
    %234 = vsyncpa [#allocation8], 1

</llo_original>
